<compile_context>
chip_gen: v6e
topology: v6e:2x2x1
jax: 0.10.0
libtpu: 0.0.40
codegen_flags: <defaults>
</compile_context>

<pallas_src>
import math

import jax
import jax.numpy as jnp
from jax.experimental import pallas as pl
from jax.experimental.pallas import tpu as pltpu


def _prompt_kernel(w_ref, x_ref, o_ref):
    # w_ref: (1, W)   x_ref: (TR, W)   o_ref: (TR, W)
    # Broadcast multiply on the VPU; explicit cast so mixed-precision
    # (f32 weight x bf16 embedding) stores cleanly into the output dtype.
    o_ref[...] = (w_ref[...] * x_ref[...]).astype(o_ref.dtype)


def _lane_dense_factor(n, h):
    """Pick r with (r*h) % 128 == 0 and n % r == 0, aiming for r*h >= 512."""
    if h % 128 == 0:
        r = 1
    else:
        r = 128 // math.gcd(h, 128)
        if n % r != 0:
            # Fall back to the original [N, H] layout (full-H blocks are legal).
            return 1
    # Widen further toward >= 512 lanes while it still divides N evenly.
    while r * h < 512 and n % (2 * r) == 0:
        r *= 2
    return r


def _pick_tile_rows(rows, width, itemsize):
    """Row tile: multiple of the sublane packing, ~4 MiB per x block."""
    sublane = {4: 8, 2: 16, 1: 32}.get(itemsize, 8)
    target_block_bytes = 4 * 1024 * 1024
    t = max(sublane, target_block_bytes // max(width * itemsize, 1))
    t = (t // sublane) * sublane
    t = min(t, 2048)
    if t >= rows:
        return rows  # full row extent is always a legal block shape
    return t


def downstream_prompt(weight, graph_embedding, *, tile_rows=None):
    """out = weight (1, H) * graph_embedding (N, H), broadcast over rows."""
    assert weight.ndim == 2 and weight.shape[0] == 1
    n, h = graph_embedding.shape
    assert weight.shape[1] == h
    out_dtype = graph_embedding.dtype
    itemsize = jnp.dtype(out_dtype).itemsize

    # --- lane-dense relayout: [N, H] -> [N/r, r*H] ---
    r = _lane_dense_factor(n, h)
    rows, width = n // r, r * h
    x2 = graph_embedding.reshape(rows, width)
    w2 = jnp.tile(weight, (1, r)) if r > 1 else weight

    if tile_rows is None:
        tile_rows = _pick_tile_rows(rows, width, itemsize)
    tile_rows = max(1, min(tile_rows, rows))
    grid = (pl.cdiv(rows, tile_rows),)  # ragged tail handled by partial block

    cost = pl.CostEstimate(
        flops=n * h,
        transcendentals=0,
        bytes_accessed=2 * n * h * itemsize + h * jnp.dtype(weight.dtype).itemsize,
    )

    out2 = pl.pallas_call(
        _prompt_kernel,
        out_shape=jax.ShapeDtypeStruct((rows, width), out_dtype),
        grid_spec=pltpu.PrefetchScalarGridSpec(
            num_scalar_prefetch=0,
            grid=grid,
            in_specs=[
                # weight: same (1, W) block every grid step (stays resident)
                pl.BlockSpec((1, width), lambda i: (0, 0)),
                # embedding: row tile i
                pl.BlockSpec((tile_rows, width), lambda i: (i, 0)),
            ],
            out_specs=pl.BlockSpec((tile_rows, width), lambda i: (i, 0)),
        ),
        compiler_params=pltpu.CompilerParams(
            dimension_semantics=("parallel",),      # megacore-shardable rows
            vmem_limit_bytes=32 * 1024 * 1024,      # safe on v5e/v6e/v7x
        ),
        cost_estimate=cost,
    )(w2, x2)

    return out2.reshape(n, h)


def init_weight(key, hid_units, dtype=jnp.float32):
    """Xavier-uniform init for a (1, hid_units) parameter (matches PyTorch)."""
    fan_in, fan_out = hid_units, 1  # torch fan for a (1, H) 2-D tensor
    bound = math.sqrt(6.0 / (fan_in + fan_out))
    return jax.random.uniform(
        key, (1, hid_units), dtype=dtype, minval=-bound, maxval=bound
    )


if __name__ == "__main__":
    key = jax.random.PRNGKey(0)
    k_w, k_x = jax.random.split(key)

    # Small shapes consistent with the module: hid_units=32, 8 graph embeddings.
    hid_units = 32
    n_graphs = 8
    weight = init_weight(k_w, hid_units)
    graph_embedding = jax.random.normal(k_x, (n_graphs, hid_units), jnp.float32)

    out = jax.block_until_ready(downstream_prompt(weight, graph_embedding))
    ref = weight * graph_embedding
    assert out.shape == ref.shape and out.dtype == ref.dtype
    assert jnp.allclose(out, ref, atol=1e-6, rtol=1e-6)

    # Exercise the multi-step grid + partial tail block path at a modest size.
    k_w2, k_x2 = jax.random.split(jax.random.PRNGKey(1))
    h2, n2 = 256, 40
    w_big = init_weight(k_w2, h2)
    x_big = jax.random.normal(k_x2, (n2, h2), jnp.float32)
    out2 = jax.block_until_ready(downstream_prompt(w_big, x_big, tile_rows=16))
    ref2 = w_big * x_big
    assert jnp.allclose(out2, ref2, atol=1e-6, rtol=1e-6)

    # Note: self.act (ELU) is defined in __init__ but never used in forward,
    # so it is intentionally not applied here.
    print("KERNEL_OK")
</pallas_src>

<mosaic_0001>
module attributes {stable_mosaic.version = 11 : i64} {
  func.func @_prompt_kernel(%arg0: i32, %arg1: memref<1x256xf32, #tpu.memory_space<vmem>>, %arg2: memref<1x256xf32, #tpu.memory_space<vmem>>, %arg3: memref<1x256xf32, #tpu.memory_space<vmem>>) attributes {dimension_semantics = [#tpu.dimension_semantics<parallel>], iteration_bounds = array<i64: 1>, scalar_prefetch = 0 : i64, scratch_operands = 0 : i64, tpu.core_type = #tpu.core_type<tc>, window_params = [{pipeline_mode = #tpu.pipeline_mode<synchronous>, transform_indices = @transform_0, window_bounds = array<i64: 1, 256>}, {transform_indices = @transform_1, window_bounds = array<i64: 1, 256>}, {transform_indices = @transform_2, window_bounds = array<i64: 1, 256>}]} {
    %c0 = arith.constant 0 : index
    %c0_0 = arith.constant 0 : index
    %0 = vector.load %arg1[%c0, %c0_0] : memref<1x256xf32, #tpu.memory_space<vmem>>, vector<1x256xf32>
    %c0_1 = arith.constant 0 : index
    %c0_2 = arith.constant 0 : index
    %1 = vector.load %arg2[%c0_1, %c0_2] : memref<1x256xf32, #tpu.memory_space<vmem>>, vector<1x256xf32>
    %2 = arith.mulf %0, %1 : vector<1x256xf32>
    %c0_3 = arith.constant 0 : index
    %c0_4 = arith.constant 0 : index
    %3 = vector.load %arg3[%c0_3, %c0_4] : memref<1x256xf32, #tpu.memory_space<vmem>>, vector<1x256xf32>
    tpu.vector_store %arg3[%c0_3, %c0_4], %2 {strides = array<i32>} : memref<1x256xf32, #tpu.memory_space<vmem>>, vector<1x256xf32>,
    return
  }
  func.func @transform_0(%arg0: i32) -> (i32, i32) {
    %c0_i32 = arith.constant 0 : i32
    %c0_i32_0 = arith.constant 0 : i32
    %c0_i32_1 = arith.constant 0 : i32
    return %c0_i32, %c0_i32_0 : i32, i32
  }
  func.func @transform_1(%arg0: i32) -> (i32, i32) {
    %c0_i32 = arith.constant 0 : i32
    %c0_i32_0 = arith.constant 0 : i32
    return %arg0, %c0_i32 : i32, i32
  }
  func.func @transform_2(%arg0: i32) -> (i32, i32) {
    %c0_i32 = arith.constant 0 : i32
    %c0_i32_0 = arith.constant 0 : i32
    return %arg0, %c0_i32 : i32, i32
  }
}

</mosaic_0001>

<llo_original>
// kernel: tpu_custom_call.1
$region0: #{tpu_custom_call.1}
  #allocation0 [shape = 'u32[]', space=smem, size = 0x4, offset = 0x4, fixed_abs, tag = 'smem constant byte address 0x4 - core index']
  #allocation1 [shape = 'u32[144,128]{1,0:T(1,128)}', space=vmem, size = 0x12000, scoped, tag = 'internal scratch']
  %s0 = inlined_call_operand.hbm [shape: f32[1,256], index: 0, kind: input, shape index: {}]
  %s1 = inlined_call_operand.hbm [shape: f32[1,256], index: 1, kind: input, shape index: {}]
  %s2 = inlined_call_operand.hbm [shape: f32[1,256], index: 2, kind: output, shape index: {}]
  %s3 = sld [smem:[#allocation0]]
  $region26: #{tpu_custom_call.1} parent=0
    _
  %s5 = ssub.s32 1, %s3
  %s6 = scalar_select 0, %s5, %s3
  $region1: #{tpu_custom_call.1} parent=0
    #allocation2 [shape = 'u8[1024]{0}', space=vmem, size = 0x400, scoped, tag = 'input window, operand 0, single buffered']
    #allocation3 [shape = 's32[1]{0}', space=sflag, size = 0x4, scoped, tag = 'scoped memory for tpu_custom_call.1']
    #allocation4 [shape = 's32[1]{0}', space=sflag, size = 0x4, scoped, tag = 'scoped memory for tpu_custom_call.1']
    #allocation5 [shape = 'u8[1024]{0}', space=vmem, size = 0x400, scoped, tag = 'input window, operand 1, single buffered']
    #allocation6 [shape = 's32[1]{0}', space=sflag, size = 0x4, scoped, tag = 'scoped memory for tpu_custom_call.1']
    #allocation7 [shape = 'u8[1024]{0}', space=vmem, size = 0x400, scoped, tag = 'output window, operand 0, single buffered']
    %7 = vsyncpa [#allocation3], 0
    %8 = vsyncpa [#allocation6], 0
    %9 = vsyncpa [#allocation4], 0
    // Predicated region
    $region2: #{tpu_custom_call.1} parent=1 // pred_check
      _
    $region3: #{tpu_custom_call.1} parent=1 // pred_check_branch
      %11 = sbr.rel (0) target = $region5
    $region4: #{tpu_custom_call.1} parent=1 // pred_region
      %s13 = ssub.s32 32, 32
      %14 = vsyncadd [#allocation3], %s13
      %s16 = sshll.u32 [#allocation2], 4
      %s17 = int_to_ptr.vmem [resolvable:$true] %s16
      %19 = dma.hbm_to_vmem [thread:$0]  %s0, 32, %s17, [#allocation3]
    $region5: #{tpu_custom_call.1} parent=1 // pred_fallthru
      _
    // Predicated region
    $region6: #{tpu_custom_call.1} parent=1 // pred_check
      _
    $region7: #{tpu_custom_call.1} parent=1 // pred_check_branch
      %21 = sbr.rel (0) target = $region9
    $region8: #{tpu_custom_call.1} parent=1 // pred_region
      %s23 = ssub.s32 32, 32
      %24 = vsyncadd [#allocation6], %s23
      %s26 = sshll.u32 [#allocation5], 4
      %s27 = int_to_ptr.vmem [resolvable:$true] %s26
      %29 = dma.hbm_to_vmem [thread:$0]  %s1, 32, %s27, [#allocation6]
    $region9: #{tpu_custom_call.1} parent=1 // pred_fallthru
      _
    // Predicated region
    $region10: #{tpu_custom_call.1} parent=1 // pred_check
      _
    $region11: #{tpu_custom_call.1} parent=1 // pred_check_branch
      %31 = sbr.rel (0) target = $region13
    $region12: #{tpu_custom_call.1} parent=1 // pred_region
      %32 = dma.done [#allocation3], 32
    $region13: #{tpu_custom_call.1} parent=1 // pred_fallthru
      _
    // Predicated region
    $region14: #{tpu_custom_call.1} parent=1 // pred_check
      _
    $region15: #{tpu_custom_call.1} parent=1 // pred_check_branch
      %34 = sbr.rel (0) target = $region17
    $region16: #{tpu_custom_call.1} parent=1 // pred_region
      %35 = dma.done [#allocation6], 32
    $region17: #{tpu_custom_call.1} parent=1 // pred_fallthru
      _
    %v36 = vld [vmem:[#allocation2] sm:$0x3]
    %v37 = vld [vmem:[#allocation5] sm:$0x3]
    %v38 = vmul.f32 %v36, %v37
    %v39 = vlaneseq
    %vm40 = vcmp.ge.s32.totalorder %v39, 0
    %vm41 = vcmp.lt.s32.totalorder %v39, 256
    %vm42 = vmand %vm40, %vm41
    %43 = vst.msk [vmem:[#allocation7] sm:$0x3] %vm42, %v38
    // Predicated region
    $region18: #{tpu_custom_call.1} parent=1 // pred_check
      _
    $region19: #{tpu_custom_call.1} parent=1 // pred_check_branch
      %45 = sbr.rel (0) target = $region21
    $region20: #{tpu_custom_call.1} parent=1 // pred_region
      %s47 = ssub.s32 32, 32
      %48 = vsyncadd [#allocation4], %s47
      %s50 = sshll.u32 [#allocation7], 4
      %s51 = int_to_ptr.vmem [resolvable:$true] %s50
      %53 = dma.vmem_to_hbm [thread:$0]  %s51, 32, %s2, [#allocation4]
    $region21: #{tpu_custom_call.1} parent=1 // pred_fallthru
      _
    // Predicated region
    $region22: #{tpu_custom_call.1} parent=1 // pred_check
      _
    $region23: #{tpu_custom_call.1} parent=1 // pred_check_branch
      %55 = sbr.rel (0) target = $region25
    $region24: #{tpu_custom_call.1} parent=1 // pred_region
      %56 = dma.done [#allocation4], 32
    $region25: #{tpu_custom_call.1} parent=1 // pred_fallthru
      _
    %57 = vsyncpa [#allocation3], 1
    %58 = vsyncpa [#allocation6], 1
    %59 = vsyncpa [#allocation4], 1

</llo_original>
